<compile_context>
chip_gen: v6e
topology: v6e:2x2x1
jax: 0.10.0
libtpu: 0.0.40
codegen_flags: <defaults>
</compile_context>

<pallas_src>
import functools
import math

import jax
import jax.numpy as jnp
from jax.experimental import pallas as pl
from jax.experimental.pallas import tpu as pltpu

# ---- module hyper-parameters (small, consistent with the module) ----
M = 1          # input coordinate dim (module default m=1)
F = 64         # fourier feature dim (must be even)
H = 32         # mlp hidden
D = 128        # output dim per head
N_HEAD = 4     # number of head copies
MAX_POS = 10000.0
SCALE = F ** (-0.5)

FOLD = 4       # rows folded into the lane dimension inside the kernel
KPAD = 8       # projection contraction dim padded to a full sublane


def _round_up(x, m):
    return ((x + m - 1) // m) * m


def _gelu_exact(x):
    # PyTorch nn.GELU() default: exact erf-based GELU.
    return 0.5 * x * (1.0 + jax.lax.erf(x / jnp.sqrt(2.0).astype(x.dtype)))


def _gelu_tanh(x):
    # PyTorch nn.GELU(approximate="tanh"); tanh runs on the EUP slot.
    c = jnp.sqrt(2.0 / jnp.pi).astype(x.dtype)
    return 0.5 * x * (1.0 + jnp.tanh(c * (x + 0.044715 * x * x * x)))


def lfpe_kernel(x_ref, wr_ref, ph_ref, w1_ref, b1_ref, w2_ref, b2_ref, o_ref,
                *, approx_gelu):
    """One tile of FOLD-row-folded positions -> (TF, FOLD*D) encodings.

    x_ref:  (TF, 8)        4 positions per folded row, lane-padded to 8
    wr_ref: (8, 4F)        block-diag wr (1/max_pos folded in; rows 4..7 zero)
    ph_ref: (1, 4F)        phase: pi/2 for the cos half, 0 for the sin half
    w1_ref: (4F, 4H)       block-diag mlp[0] weight, pre-scaled by f**-0.5
    b1_ref: (1, 4H)
    w2_ref: (4H, 4D), b2_ref: (1, 4D)
    o_ref:  (TF, 4D)       row-major == (4*TF, D) of per-row encodings
    """
    pos = x_ref[...]                                                    # (TF, 8)
    proj = jnp.dot(pos, wr_ref[...],
                   preferred_element_type=jnp.float32) + ph_ref[...]   # (TF, 4F)
    feat = jnp.sin(proj)            # sin(z + pi/2) == cos(z); one EUP pass
    hid = jnp.dot(feat, w1_ref[...],
                  preferred_element_type=jnp.float32) + b1_ref[...]    # (TF, 4H)
    hid = _gelu_tanh(hid) if approx_gelu else _gelu_exact(hid)
    o_ref[...] = jnp.dot(hid, w2_ref[...],
                         preferred_element_type=jnp.float32) + b2_ref[...]


@functools.partial(jax.jit, static_argnames=("approx_gelu",))
def learnable_fourier_pe(x, wr, w1, b1, w2, b2, *, approx_gelu=False):
    """x: (B, T) positions -> (B, T, N_HEAD*D) float32."""
    B, T = x.shape
    N = B * T

    # ---- tiling: folded rows (4 original rows per folded row) ----
    nf = _round_up(pl.cdiv(N, FOLD), 8)          # folded rows, >= one sublane
    TF_CAP = 512                                 # 512 folded = 2048 orig rows
    if nf <= 8:
        tf, grid = nf, 1                         # tiny input: don't over-pad
    else:
        grid = max(2, pl.cdiv(nf, TF_CAP))       # >=2 steps -> v7x dual-core
        tf = _round_up(pl.cdiv(nf, grid), 8)
    nf_pad = tf * grid
    n_rows_pad = nf_pad * FOLD

    # ---- positions: flatten, pad, fold 4-per-row, lane-pad K to 8 ----
    x_flat = x.reshape(-1).astype(jnp.float32)
    if n_rows_pad != N:
        x_flat = jnp.pad(x_flat, (0, n_rows_pad - N))
    x_fold = x_flat.reshape(nf_pad, FOLD)
    x_fold = jnp.pad(x_fold, ((0, 0), (0, KPAD - FOLD)))            # (nf, 8)

    # ---- weight prep (tiny; constant-folded / fused by XLA) ----
    # cos(z) = sin(z + pi/2): one transcendental pass, no lane concat.
    wr2 = jnp.concatenate([wr, wr], axis=-1) / MAX_POS               # (1, F)
    phase = jnp.concatenate(
        [jnp.full((F // 2,), jnp.pi / 2, jnp.float32),
         jnp.zeros((F // 2,), jnp.float32)])                         # (F,)
    eye = jnp.eye(FOLD, dtype=jnp.float32)
    wr_bd = jnp.pad(jnp.kron(eye, wr2), ((0, KPAD - FOLD), (0, 0)))  # (8, 4F)
    ph_t = jnp.tile(phase, FOLD).reshape(1, FOLD * F)                # (1, 4F)
    w1_bd = jnp.kron(eye, SCALE * w1)                                # (4F, 4H)
    b1_t = jnp.tile(b1, FOLD).reshape(1, FOLD * H)
    w2_bd = jnp.kron(eye, w2)                                        # (4H, 4D)
    b2_t = jnp.tile(b2, FOLD).reshape(1, FOLD * D)

    cost = pl.CostEstimate(
        flops=nf_pad * 2 * (KPAD * FOLD * F
                            + FOLD * F * FOLD * H
                            + FOLD * H * FOLD * D),
        transcendentals=nf_pad * FOLD * (F + H),     # sin + erf/tanh
        bytes_accessed=(nf_pad * KPAD * 4            # positions
                        + nf_pad * FOLD * D * 4      # output
                        + 4 * (KPAD * FOLD * F + FOLD * F
                               + FOLD * F * FOLD * H + FOLD * H
                               + FOLD * H * FOLD * D + FOLD * D)),
    )

    out = pl.pallas_call(
        functools.partial(lfpe_kernel, approx_gelu=approx_gelu),
        out_shape=jax.ShapeDtypeStruct((nf_pad, FOLD * D), jnp.float32),
        grid_spec=pltpu.PrefetchScalarGridSpec(
            num_scalar_prefetch=0,
            grid=(grid,),
            in_specs=[
                pl.BlockSpec((tf, KPAD), lambda i: (i, 0)),          # positions
                pl.BlockSpec((KPAD, FOLD * F), lambda i: (0, 0)),    # wr (resident)
                pl.BlockSpec((1, FOLD * F), lambda i: (0, 0)),       # phase
                pl.BlockSpec((FOLD * F, FOLD * H), lambda i: (0, 0)),  # mlp[0] W
                pl.BlockSpec((1, FOLD * H), lambda i: (0, 0)),         # mlp[0] b
                pl.BlockSpec((FOLD * H, FOLD * D), lambda i: (0, 0)),  # mlp[2] W
                pl.BlockSpec((1, FOLD * D), lambda i: (0, 0)),         # mlp[2] b
            ],
            out_specs=pl.BlockSpec((tf, FOLD * D), lambda i: (i, 0)),
        ),
        compiler_params=pltpu.CompilerParams(
            dimension_semantics=("parallel",)),
        cost_estimate=cost,
    )(x_fold, wr_bd, ph_t, w1_bd, b1_t, w2_bd, b2_t)

    # (nf_pad, 4D) -> (4*nf_pad, D) is a free row-major reshape; drop padding.
    y = out.reshape(n_rows_pad, D)[:N].reshape(B, T, D)
    # torch.cat([y]*n_head, dim=2): replicate along the feature axis in the
    # consumer (lazy XLA broadcast) instead of 4x HBM write amplification
    # inside the kernel.  Consumers that can index per head should use the
    # (B, T, D) tensor directly to keep the broadcast fused.
    return jnp.broadcast_to(y[:, :, None, :], (B, T, N_HEAD, D)).reshape(
        B, T, N_HEAD * D)


def init_params(key):
    """Deterministic synthetic parameters (PyTorch-Linear-like uniform init)."""
    k0, k1, k2, k3, k4 = jax.random.split(key, 5)

    def lin_w(k, fan_in, fan_out):
        bound = 1.0 / math.sqrt(fan_in)
        # stored as (fan_in, fan_out) so the math is x @ W
        return jax.random.uniform(k, (fan_in, fan_out), jnp.float32, -bound, bound)

    def lin_b(k, fan_in, fan_out):
        bound = 1.0 / math.sqrt(fan_in)
        return jax.random.uniform(k, (fan_out,), jnp.float32, -bound, bound)

    wr = lin_w(k0, M, F // 2)          # nn.Linear(m, f//2, bias=False)
    w1 = lin_w(k1, F, H)               # nn.Linear(f, h)
    b1 = lin_b(k2, F, H)
    w2 = lin_w(k3, H, D)               # nn.Linear(h, d)
    b2 = lin_b(k4, H, D)
    return wr, w1, b1, w2, b2


def reference(x, wr, w1, b1, w2, b2):
    """Pure-JAX reference mirroring the PyTorch forward (for sanity check)."""
    p = x[..., None].astype(jnp.float32) / MAX_POS                # (B, T, 1)
    proj = p @ wr                                                  # (B, T, F//2)
    feat = SCALE * jnp.concatenate([jnp.cos(proj), jnp.sin(proj)], axis=-1)
    hid = _gelu_exact(feat @ w1 + b1)
    y = hid @ w2 + b2
    return jnp.concatenate([y] * N_HEAD, axis=2)


if __name__ == "__main__":
    key = jax.random.PRNGKey(0)
    kp, kx = jax.random.split(key)
    wr, w1, b1, w2, b2 = init_params(kp)

    B, T = 2, 8
    # integer-like positions 0..T-1 per batch element (typical L-TAE usage)
    x = jnp.tile(jnp.arange(T, dtype=jnp.float32)[None, :], (B, 1))

    out = learnable_fourier_pe(x, wr, w1, b1, w2, b2)   # exact-GELU path
    out = jax.block_until_ready(out)

    ref = reference(x, wr, w1, b1, w2, b2)
    assert out.shape == (B, T, N_HEAD * D), out.shape
    assert jnp.allclose(out, ref, atol=1e-5, rtol=1e-5), \
        float(jnp.max(jnp.abs(out - ref)))

    # Optional faster numerics path (tanh-GELU on the EUP); looser tolerance.
    out_fast = jax.block_until_ready(
        learnable_fourier_pe(x, wr, w1, b1, w2, b2, approx_gelu=True))
    assert jnp.allclose(out_fast, ref, atol=5e-3, rtol=5e-3), \
        float(jnp.max(jnp.abs(out_fast - ref)))

    print("KERNEL_OK")
</pallas_src>

<mosaic_0001>
module attributes {stable_mosaic.version = 11 : i64} {
  func.func @lfpe_kernel(%arg0: i32, %arg1: memref<8x8xf32, #tpu.memory_space<vmem>>, %arg2: memref<8x256xf32, #tpu.memory_space<vmem>>, %arg3: memref<1x256xf32, #tpu.memory_space<vmem>>, %arg4: memref<256x128xf32, #tpu.memory_space<vmem>>, %arg5: memref<1x128xf32, #tpu.memory_space<vmem>>, %arg6: memref<128x512xf32, #tpu.memory_space<vmem>>, %arg7: memref<1x512xf32, #tpu.memory_space<vmem>>, %arg8: memref<8x512xf32, #tpu.memory_space<vmem>>) attributes {dimension_semantics = [#tpu.dimension_semantics<parallel>], iteration_bounds = array<i64: 1>, scalar_prefetch = 0 : i64, scratch_operands = 0 : i64, tpu.core_type = #tpu.core_type<tc>, window_params = [{transform_indices = @transform_0, window_bounds = array<i64: 8, 8>}, {pipeline_mode = #tpu.pipeline_mode<synchronous>, transform_indices = @transform_1, window_bounds = array<i64: 8, 256>}, {pipeline_mode = #tpu.pipeline_mode<synchronous>, transform_indices = @transform_2, window_bounds = array<i64: 1, 256>}, {pipeline_mode = #tpu.pipeline_mode<synchronous>, transform_indices = @transform_3, window_bounds = array<i64: 256, 128>}, {pipeline_mode = #tpu.pipeline_mode<synchronous>, transform_indices = @transform_4, window_bounds = array<i64: 1, 128>}, {pipeline_mode = #tpu.pipeline_mode<synchronous>, transform_indices = @transform_5, window_bounds = array<i64: 128, 512>}, {pipeline_mode = #tpu.pipeline_mode<synchronous>, transform_indices = @transform_6, window_bounds = array<i64: 1, 512>}, {transform_indices = @transform_7, window_bounds = array<i64: 8, 512>}]} {
    %c0 = arith.constant 0 : index
    %c0_0 = arith.constant 0 : index
    %0 = vector.load %arg1[%c0, %c0_0] : memref<8x8xf32, #tpu.memory_space<vmem>>, vector<8x8xf32>
    %c0_1 = arith.constant 0 : index
    %c0_2 = arith.constant 0 : index
    %1 = vector.load %arg2[%c0_1, %c0_2] : memref<8x256xf32, #tpu.memory_space<vmem>>, vector<8x256xf32>
    %cst = arith.constant dense<0.000000e+00> : vector<8x256xf32>
    %2 = tpu.matmul %0, %1, %cst {dimension_numbers = #tpu.dot_dimension_numbers<[1], [0], [0], [1], [0, 0, 1, 1], [], []>} : vector<8x8xf32>, vector<8x256xf32>, vector<8x256xf32> -> vector<8x256xf32>
    %c0_3 = arith.constant 0 : index
    %c0_4 = arith.constant 0 : index
    %3 = vector.load %arg3[%c0_3, %c0_4] : memref<1x256xf32, #tpu.memory_space<vmem>>, vector<1x256xf32>
    %4 = vector.broadcast %3 : vector<1x256xf32> to vector<8x256xf32>
    %5 = arith.addf %2, %4 : vector<8x256xf32>
    %6 = math.sin %5 : vector<8x256xf32>
    %c0_5 = arith.constant 0 : index
    %c0_6 = arith.constant 0 : index
    %7 = vector.load %arg4[%c0_5, %c0_6] : memref<256x128xf32, #tpu.memory_space<vmem>>, vector<256x128xf32>
    %cst_7 = arith.constant dense<0.000000e+00> : vector<8x128xf32>
    %8 = tpu.matmul %6, %7, %cst_7 {dimension_numbers = #tpu.dot_dimension_numbers<[1], [0], [0], [1], [0, 0, 1, 1], [], []>} : vector<8x256xf32>, vector<256x128xf32>, vector<8x128xf32> -> vector<8x128xf32>
    %c0_8 = arith.constant 0 : index
    %c0_9 = arith.constant 0 : index
    %9 = vector.load %arg5[%c0_8, %c0_9] : memref<1x128xf32, #tpu.memory_space<vmem>>, vector<1x128xf32>
    %10 = vector.broadcast %9 : vector<1x128xf32> to vector<8x128xf32>
    %11 = arith.addf %8, %10 : vector<8x128xf32>
    %cst_10 = arith.constant 5.000000e-01 : f32
    %12 = vector.broadcast %cst_10 : f32 to vector<8x128xf32>
    %13 = arith.mulf %12, %11 : vector<8x128xf32>
    %cst_11 = arith.constant 2.000000e+00 : f32
    %14 = math.sqrt %cst_11 : f32
    %15 = vector.broadcast %14 : f32 to vector<8x128xf32>
    %16 = arith.divf %11, %15 : vector<8x128xf32>
    %17 = math.erf %16 : vector<8x128xf32>
    %cst_12 = arith.constant 1.000000e+00 : f32
    %18 = vector.broadcast %cst_12 : f32 to vector<8x128xf32>
    %19 = arith.addf %18, %17 : vector<8x128xf32>
    %20 = arith.mulf %13, %19 : vector<8x128xf32>
    %c0_13 = arith.constant 0 : index
    %c0_14 = arith.constant 0 : index
    %21 = vector.load %arg6[%c0_13, %c0_14] : memref<128x512xf32, #tpu.memory_space<vmem>>, vector<128x512xf32>
    %cst_15 = arith.constant dense<0.000000e+00> : vector<8x512xf32>
    %22 = tpu.matmul %20, %21, %cst_15 {dimension_numbers = #tpu.dot_dimension_numbers<[1], [0], [0], [1], [0, 0, 1, 1], [], []>} : vector<8x128xf32>, vector<128x512xf32>, vector<8x512xf32> -> vector<8x512xf32>
    %c0_16 = arith.constant 0 : index
    %c0_17 = arith.constant 0 : index
    %23 = vector.load %arg7[%c0_16, %c0_17] : memref<1x512xf32, #tpu.memory_space<vmem>>, vector<1x512xf32>
    %24 = vector.broadcast %23 : vector<1x512xf32> to vector<8x512xf32>
    %25 = arith.addf %22, %24 : vector<8x512xf32>
    %c0_18 = arith.constant 0 : index
    %c0_19 = arith.constant 0 : index
    %26 = vector.load %arg8[%c0_18, %c0_19] : memref<8x512xf32, #tpu.memory_space<vmem>>, vector<8x512xf32>
    tpu.vector_store %arg8[%c0_18, %c0_19], %25 {strides = array<i32>} : memref<8x512xf32, #tpu.memory_space<vmem>>, vector<8x512xf32>,
    return
  }
  func.func @transform_0(%arg0: i32) -> (i32, i32) {
    %c0_i32 = arith.constant 0 : i32
    %c0_i32_0 = arith.constant 0 : i32
    return %arg0, %c0_i32 : i32, i32
  }
  func.func @transform_1(%arg0: i32) -> (i32, i32) {
    %c0_i32 = arith.constant 0 : i32
    %c0_i32_0 = arith.constant 0 : i32
    %c0_i32_1 = arith.constant 0 : i32
    return %c0_i32, %c0_i32_0 : i32, i32
  }
  func.func @transform_2(%arg0: i32) -> (i32, i32) {
    %c0_i32 = arith.constant 0 : i32
    %c0_i32_0 = arith.constant 0 : i32
    %c0_i32_1 = arith.constant 0 : i32
    return %c0_i32, %c0_i32_0 : i32, i32
  }
  func.func @transform_3(%arg0: i32) -> (i32, i32) {
    %c0_i32 = arith.constant 0 : i32
    %c0_i32_0 = arith.constant 0 : i32
    %c0_i32_1 = arith.constant 0 : i32
    return %c0_i32, %c0_i32_0 : i32, i32
  }
  func.func @transform_4(%arg0: i32) -> (i32, i32) {
    %c0_i32 = arith.constant 0 : i32
    %c0_i32_0 = arith.constant 0 : i32
    %c0_i32_1 = arith.constant 0 : i32
    return %c0_i32, %c0_i32_0 : i32, i32
  }
  func.func @transform_5(%arg0: i32) -> (i32, i32) {
    %c0_i32 = arith.constant 0 : i32
    %c0_i32_0 = arith.constant 0 : i32
    %c0_i32_1 = arith.constant 0 : i32
    return %c0_i32, %c0_i32_0 : i32, i32
  }
  func.func @transform_6(%arg0: i32) -> (i32, i32) {
    %c0_i32 = arith.constant 0 : i32
    %c0_i32_0 = arith.constant 0 : i32
    %c0_i32_1 = arith.constant 0 : i32
    return %c0_i32, %c0_i32_0 : i32, i32
  }
  func.func @transform_7(%arg0: i32) -> (i32, i32) {
    %c0_i32 = arith.constant 0 : i32
    %c0_i32_0 = arith.constant 0 : i32
    return %arg0, %c0_i32 : i32, i32
  }
}

</mosaic_0001>

<llo_original>
// kernel: tile.17
$region0: #{tile.17}
  %s0 = inlined_call_operand.vmem [shape: f32[4,64], index: 0, kind: input, shape index: {}]
  %s1 = inlined_call_operand.vmem [shape: f32[1,256], index: 1, kind: output, shape index: {}]
  $region1: #{tile.17} parent=0
    #allocation0 [shape = 'u8[8192]{0}', space=vmem, size = 0x2000, scoped, tag = 'scoped mem for output reshape']
    #allocation1 [shape = 'u8[4096]{0}', space=vmem, size = 0x1000, scoped, tag = 'scoped mem for input reshape']
    %s3 = sshll.u32 1, 4
    %s4 = ssub.s32 %s3, 1
    %v5 = vld [vmem:[%s0] sm:%s4]
    %6 = vst [vmem:[#allocation1] sm:%s4] %v5
    %s7 = smov 3
    %v8 = vld [vmem:[#allocation1] ss:$2 sm:%s7]
    %vm9 = vcmask 523264
    %10 = vst.msk [vmem:[#allocation0] ss:$8 sm:$0x3] %vm9, %v8
    %s11 = scalar_lea.vmem [#allocation1], 1
    %s12 = smov 3
    %v13 = vld [vmem:[%s11] ss:$2 sm:%s12]
    %14 = vrot.lane.b32.xlu0 %v13, 64
    %v15 = vpop.permute.xlu0 %14
    %vm16 = vcmask 1048064
    %17 = vst.msk [vmem:[#allocation0] ss:$8 sm:$0x3] %vm16, %v15
    %s19 = sshll.u32 1, 1
    %s20 = ssub.s32 %s19, 1
    %v22 = vld [vmem:[#allocation0] sm:%s20]
    %s23 = sshll.u32 1, 1
    %s24 = ssub.s32 %s23, 1
    %25 = vst [vmem:[%s1] sm:%s24] %v22
    %s26 = scalar_lea.vmem [#allocation0], 8
    %v27 = vld [vmem:[%s26] sm:%s20]
    %s28 = sshll.u32 1, 1
    %s29 = ssub.s32 %s28, 1
    %s30 = scalar_lea.vmem %s1, 1
    %31 = vst [vmem:[%s30] sm:%s29] %v27

// kernel: tile.22
$region0: #{tile.22}
  %s0 = inlined_call_operand.vmem [shape: f32[4,32], index: 0, kind: input, shape index: {}]
  %s1 = inlined_call_operand.vmem [shape: f32[1,128], index: 1, kind: output, shape index: {}]
  $region1: #{tile.22} parent=0
    #allocation0 [shape = 'u8[4096]{0}', space=vmem, size = 0x1000, scoped, tag = 'scoped mem for output reshape']
    #allocation1 [shape = 'u8[4096]{0}', space=vmem, size = 0x1000, scoped, tag = 'scoped mem for input reshape']
    %s3 = sshll.u32 1, 4
    %s4 = ssub.s32 %s3, 1
    %v5 = vld [vmem:[%s0] sm:%s4]
    %6 = vst [vmem:[#allocation1] sm:%s4] %v5
    %v7 = vld [vmem:[#allocation1] sm:$0x1]
    %vm8 = vcmask 261120
    %9 = vst.msk [vmem:[#allocation0] sm:$0x1] %vm8, %v7
    %s10 = scalar_lea.vmem [#allocation1], 3
    %v11 = vld [vmem:[%s10] sm:$0x1]
    %12 = vrot.lane.b32.xlu0 %v11, 96
    %v13 = vpop.permute.xlu0 %12
    %vm14 = vcmask 1048320
    %15 = vst.msk [vmem:[#allocation0] sm:$0x1] %vm14, %v13
    %s16 = scalar_lea.vmem [#allocation1], 2
    %v17 = vld [vmem:[%s16] sm:$0x1]
    %18 = vrot.lane.b32.xlu0 %v17, 64
    %v19 = vpop.permute.xlu0 %18
    %vm20 = vcmask 785920
    %21 = vst.msk [vmem:[#allocation0] sm:$0x1] %vm20, %v19
    %s22 = scalar_lea.vmem [#allocation1], 1
    %v23 = vld [vmem:[%s22] sm:$0x1]
    %24 = vrot.lane.b32.xlu0 %v23, 32
    %v25 = vpop.permute.xlu0 %24
    %vm26 = vcmask 523520
    %27 = vst.msk [vmem:[#allocation0] sm:$0x1] %vm26, %v25
    %s29 = sshll.u32 1, 1
    %s30 = ssub.s32 %s29, 1
    %v32 = vld [vmem:[#allocation0] sm:%s30]
    %s33 = sshll.u32 1, 1
    %s34 = ssub.s32 %s33, 1
    %35 = vst [vmem:[%s1] sm:%s34] %v32

// kernel: tile.21
$region0: #{tile.21}
  #allocation0 [shape = 's32[1]{0}', space=sflag, size = 0x4, scoped, tag = 'scoped memory for tile.21']
  %s0 = inlined_call_operand.vmem [shape: f32[32], index: 0, kind: input, shape index: {}]
  %s1 = inlined_call_operand.vmem [shape: f32[4,32], index: 1, kind: output, shape index: {}]
  // Predicated region
  $region2: #{tile.21} parent=0 // pred_check
    _
  $region3: #{tile.21} parent=0 // pred_check_branch
    %3 = sbr.rel (0) target = $region5
  $region4: #{tile.21} parent=0 // pred_region
    _
  $region5: #{tile.21} parent=0 // pred_fallthru
    _
  %v4 = vld [vmem:[%s0] ss:$0 sm:$0xff]
  %5 = vst [vmem:[%s1] sm:$0xf] %v4

// kernel: tile.26
$region0: #{tile.26}
  #allocation0 [shape = 's32[1]{0}', space=sflag, size = 0x4, scoped, tag = 'scoped memory for tile.26']
  %s0 = inlined_call_operand.vmem [shape: f32[128], index: 0, kind: input, shape index: {}]
  %s1 = inlined_call_operand.vmem [shape: f32[4,128], index: 1, kind: output, shape index: {}]
  // Predicated region
  $region2: #{tile.26} parent=0 // pred_check
    _
  $region3: #{tile.26} parent=0 // pred_check_branch
    %3 = sbr.rel (0) target = $region5
  $region4: #{tile.26} parent=0 // pred_region
    _
  $region5: #{tile.26} parent=0 // pred_fallthru
    _
  %v4 = vld [vmem:[%s0] ss:$0 sm:$0xff]
  %5 = vst [vmem:[%s1] sm:$0xf] %v4

// kernel: learnable_fourier_pe.1
$region0: #{learnable_fourier_pe.1}
  #allocation0 [shape = 'u32[]', space=smem, size = 0x4, offset = 0x4, fixed_abs, tag = 'smem constant byte address 0x4 - core index']
  #allocation1 [shape = 'u32[144,128]{1,0:T(1,128)}', space=vmem, size = 0x12000, scoped, tag = 'internal scratch']
  %s0 = inlined_call_operand.vmem [shape: f32[8,8], index: 0, kind: input, shape index: {}]
  %s1 = inlined_call_operand.vmem [shape: f32[8,256], index: 1, kind: input, shape index: {}]
  %s2 = inlined_call_operand.vmem [shape: f32[1,256], index: 2, kind: input, shape index: {}]
  %s3 = inlined_call_operand.vmem [shape: f32[256,128], index: 3, kind: input, shape index: {}]
  %s4 = inlined_call_operand.vmem [shape: f32[1,128], index: 4, kind: input, shape index: {}]
  %s5 = inlined_call_operand.vmem [shape: f32[128,512], index: 5, kind: input, shape index: {}]
  %s6 = inlined_call_operand.vmem [shape: f32[1,512], index: 6, kind: input, shape index: {}]
  %s7 = inlined_call_operand.vmem [shape: f32[8,512], index: 7, kind: output, shape index: {}]
  %s8 = sld [smem:[#allocation0]]
  $region38: #{learnable_fourier_pe.1} parent=0
    _
  %s10 = ssub.s32 1, %s8
  %s11 = scalar_select 0, %s10, %s8
  // Predicated region
  $region2: #{learnable_fourier_pe.1} parent=0 // pred_check
    _
  $region3: #{learnable_fourier_pe.1} parent=0 // pred_check_branch
    %13 = sbr.rel (0) target = $region5
  $region4: #{learnable_fourier_pe.1} parent=0 // pred_region
    _
  $region5: #{learnable_fourier_pe.1} parent=0 // pred_fallthru
    _
  // Predicated region
  $region6: #{learnable_fourier_pe.1} parent=0 // pred_check
    _
  $region7: #{learnable_fourier_pe.1} parent=0 // pred_check_branch
    %15 = sbr.rel (0) target = $region9
  $region8: #{learnable_fourier_pe.1} parent=0 // pred_region
    _
  $region9: #{learnable_fourier_pe.1} parent=0 // pred_fallthru
    _
  // Predicated region
  $region10: #{learnable_fourier_pe.1} parent=0 // pred_check
    _
  $region11: #{learnable_fourier_pe.1} parent=0 // pred_check_branch
    %17 = sbr.rel (0) target = $region13
  $region12: #{learnable_fourier_pe.1} parent=0 // pred_region
    _
  $region13: #{learnable_fourier_pe.1} parent=0 // pred_fallthru
    _
  // Predicated region
  $region14: #{learnable_fourier_pe.1} parent=0 // pred_check
    _
  $region15: #{learnable_fourier_pe.1} parent=0 // pred_check_branch
    %19 = sbr.rel (0) target = $region17
  $region16: #{learnable_fourier_pe.1} parent=0 // pred_region
    _
  $region17: #{learnable_fourier_pe.1} parent=0 // pred_fallthru
    _
  // Predicated region
  $region18: #{learnable_fourier_pe.1} parent=0 // pred_check
    _
  $region19: #{learnable_fourier_pe.1} parent=0 // pred_check_branch
    %21 = sbr.rel (0) target = $region21
  $region20: #{learnable_fourier_pe.1} parent=0 // pred_region
    _
  $region21: #{learnable_fourier_pe.1} parent=0 // pred_fallthru
    _
  // Predicated region
  $region22: #{learnable_fourier_pe.1} parent=0 // pred_check
    _
  $region23: #{learnable_fourier_pe.1} parent=0 // pred_check_branch
    %23 = sbr.rel (0) target = $region25
  $region24: #{learnable_fourier_pe.1} parent=0 // pred_region
    _
  $region25: #{learnable_fourier_pe.1} parent=0 // pred_fallthru
    _
  // Predicated region
  $region26: #{learnable_fourier_pe.1} parent=0 // pred_check
    _
  $region27: #{learnable_fourier_pe.1} parent=0 // pred_check_branch
    %25 = sbr.rel (0) target = $region29
  $region28: #{learnable_fourier_pe.1} parent=0 // pred_region
    _
  $region29: #{learnable_fourier_pe.1} parent=0 // pred_fallthru
    _
  %v26 = vld [vmem:[%s0] sm:$0xff]
  %v27 = vld [vmem:[%s1] sm:$0xff]
  %v28 = vld [vmem:[%s1 + $0x8] sm:$0xff]
  %v29 = vld [vmem:[%s2] sm:$0x3]
  %v31 = vlaneseq
  %v32 = vshrl.u32 %v31, 7
  %v33 = vsub.s32 0, %v32
  %v34 = vrot.slane %v29, %v33
  %v35 = vlaneseq
  %v36 = vshrl.u32 %v35, 7
  %v37 = vsub.s32 1, %v36
  %v38 = vrot.slane %v29, %v37
  %vm41 = vcmask 64512
  %v43 = vsel %vm41, %v26, 0
  %45 = vmatprep.subr.mxu0 0.0
  %46 = vmatpush1.msra.mxu0 0.0
  %47 = vmatprep.subr.mxu0 0.0
  %48 = vmatpush1.msra.mxu0 0.0
  %49 = vmatprep.subr.mxu0 0.0
  %50 = vmatpush1.msra.mxu0 0.0
  %51 = vmatprep.subr.mxu0 0.0
  %52 = vmatpush1.msra.mxu0 0.0
  %53 = vmatprep.subr.mxu0 0.0
  %54 = vmatpush1.msra.mxu0 0.0
  %55 = vmatprep.subr.mxu0 0.0
  %56 = vmatpush1.msra.mxu0 0.0
  %57 = vmatprep.subr.mxu0 0.0
  %58 = vmatpush1.msra.mxu0 0.0
  %59 = vmatprep.subr.mxu0 0.0
  %60 = vmatpush1.msra.mxu0 0.0
  %61 = vmatprep.subr.mxu0 0.0
  %62 = vmatpush1.msra.mxu0 0.0
  %63 = vmatprep.subr.mxu0 0.0
  %64 = vmatpush1.msra.mxu0 0.0
  %65 = vmatprep.subr.mxu0 0.0
  %66 = vmatpush1.msra.mxu0 0.0
  %67 = vmatprep.subr.mxu0 0.0
  %68 = vmatpush1.msra.mxu0 0.0
  %69 = vmatprep.subr.mxu0 0.0
  %70 = vmatpush1.msra.mxu0 0.0
  %71 = vmatprep.subr.mxu0 0.0
  %72 = vmatpush1.msra.mxu0 0.0
  %73 = vmatprep.subr.mxu0 0.0
  %74 = vmatpush1.msra.mxu0 0.0
  %75 = vmatprep.subr.mxu0 %v28
  %76 = vmatpush1.msra.mxu0 %v27
  %77 = vmatprep.subr.mxu0 0.0
  %78 = vmatpush2.msra.mxu0 0.0
  %79 = vmatprep.subr.mxu0 0.0
  %80 = vmatpush2.msra.mxu0 0.0
  %81 = vmatprep.subr.mxu0 0.0
  %82 = vmatpush2.msra.mxu0 0.0
  %83 = vmatprep.subr.mxu0 0.0
  %84 = vmatpush2.msra.mxu0 0.0
  %85 = vmatprep.subr.mxu0 0.0
  %86 = vmatpush2.msra.mxu0 0.0
  %87 = vmatprep.subr.mxu0 0.0
  %88 = vmatpush2.msra.mxu0 0.0
  %89 = vmatprep.subr.mxu0 0.0
  %90 = vmatpush2.msra.mxu0 0.0
  %91 = vmatprep.subr.mxu0 0.0
  %92 = vmatpush2.msra.mxu0 0.0
  %93 = vmatprep.subr.mxu0 0.0
  %94 = vmatpush2.msra.mxu0 0.0
  %95 = vmatprep.subr.mxu0 0.0
  %96 = vmatpush2.msra.mxu0 0.0
  %97 = vmatprep.subr.mxu0 0.0
  %98 = vmatpush2.msra.mxu0 0.0
  %99 = vmatprep.subr.mxu0 0.0
  %100 = vmatpush2.msra.mxu0 0.0
  %101 = vmatprep.subr.mxu0 0.0
  %102 = vmatpush2.msra.mxu0 0.0
  %103 = vmatprep.subr.mxu0 0.0
  %104 = vmatpush2.msra.mxu0 0.0
  %105 = vmatprep.subr.mxu0 0.0
  %106 = vmatpush2.msra.mxu0 0.0
  %107 = vmatprep.subr.mxu0 0.0
  %108 = vmatpush2.msra.mxu0 0.0
  %109 = vmatprep.mubr.f32.mxu0 0.0
  %110 = vmatmul.mubr.f32.gmra.mxu0 %v43
  %v111 = vpop.f32.mrf.mxu0
  %v112 = vadd.f32 %v34, %v111
  %v113 = vpop.f32.mrf.mxu0
  %v114 = vadd.f32 %v38, %v113
  %115 = vdwg.mxu0
  %v116 = vand.u32 2147483647, %v112
  %vm117 = vcmp.le.f32.partialorder %v116, 0.7853982
  %vm118 = vcmp.lt.s32.totalorder %v112, 0
  %v119 = vand.u32 %v112, 2139095040
  %v120 = vshrl.u32 %v119, 23
  %v121 = vsub.s32 %v120, 127
  %v122 = vand.u32 2147483647, %v112
  %v123 = vand.u32 %v122, 8388607
  %v124 = vor.u32 %v123, 8388608
  %v125 = vsub.s32 0, %v124
  %v126 = vadd.s32 %v121, 1
  %vm127 = vcmp.gt.s32.totalorder %v126, 0
  %v128 = vsel %vm127, %v126, 0
  %v129 = vshrl.u32 %v128, 5
  %v130 = vand.u32 %v128, 31
  %v131 = vsub.s32 32, %v130
  %v132 = vshrl.u32 683565275, %v131
  %v133 = vshll.u32 683565275, %v130
  %v134 = vshrl.u32 2475754826, %v131
  %v135 = vor.u32 %v133, %v134
  %v136 = vshll.u32 2475754826, %v130
  %v137 = vshrl.u32 2131351028, %v131
  %v138 = vor.u32 %v136, %v137
  %v139 = vshll.u32 2131351028, %v130
  %v140 = vshrl.u32 2102212464, %v131
  %v141 = vor.u32 %v139, %v140
  %v142 = vshll.u32 2102212464, %v130
  %v143 = vshrl.u32 920167782, %v131
  %v144 = vor.u32 %v142, %v143
  %v145 = vshll.u32 920167782, %v130
  %v146 = vshrl.u32 1326507024, %v131
  %v147 = vor.u32 %v145, %v146
  %vm148 = vcmp.lt.s32.totalorder %v129, 1
  %vm149 = vcmp.lt.s32.totalorder %v129, 2
  %vm150 = vcmp.lt.s32.totalorder %v129, 3
  %vm151 = vcmp.lt.s32.totalorder %v129, 4
  %v152 = vsel %vm148, %v132, %v135
  %v153 = vsel %vm151, %v141, 2102212464
  %v154 = vsel %vm150, %v138, %v153
  %v155 = vsel %vm149, %v152, %v154
  %v156 = vsel %vm148, %v135, %v138
  %v157 = vsel %vm151, %v144, 920167782
  %v158 = vsel %vm150, %v141, %v157
  %v159 = vsel %vm149, %v156, %v158
  %v160 = vsel %vm148, %v138, %v141
  %v161 = vsel %vm151, %v147, 1326507024
  %v162 = vsel %vm150, %v144, %v161
  %v163 = vsel %vm149, %v160, %v162
  %v164 = vshll.u32 %v124, 8
  %v165 = vmul.u32.u64.compose %v164, %v163
  %v166 = vextract.low.u32 %v165
  %v167 = vextract.high.u32 %v165
  %v168 = vmul.u32.u64.compose %v164, %v159
  %v169 = vextract.low.u32 %v168
  %v170 = vextract.high.u32 %v168
  %v171 = vmul.u32 %v164, %v155
  %v172 = vadd.s32 %v167, %v169
  %vm173 = vc.u32 %v167, %v169
  %v174 = vadd.s32 %v170, 1
  %v175 = vsel %vm173, %v174, %v170
  %v176 = vadd.s32 %v171, %v175
  %v177 = vadd.s32 %v176, 536870912
  %v178 = vshrl.u32 %v177, 30
  %v179 = vshll.u32 %v178, 30
  %v180 = vsub.s32 %v176, %v179
  %vm181 = vcmp.lt.s32.totalorder %v180, 0
  %v182 = vsub.s32 0, %v180
  %v183 = vsel %vm181, %v182, %v180
  %v184 = vclz %v183
  %v185 = vsub.s32 %v184, 2
  %vm186 = vcmp.gt.s32.totalorder 0, %v185
  %v187 = vsel %vm186, 0, %v185
  %v188 = vsub.s32 32, %v187
  %v189 = vshll.u32 %v180, %v187
  %v190 = vshrl.u32 %v172, %v188
  %v191 = vor.u32 %v189, %v190
  %v192 = vsub.s32 4294967266, %v187
  %v193 = vadd.s32 %v192, 127
  %v194 = vshll.u32 %v193, 23
  %v195 = vor.u32 4788187, %v194
  %v196 = vand.u32 2147483647, %v195
  %v198 = vcvt.s32.f32 %v191
  %v199 = vmul.f32 %v198, %v196
  %v200 = vxor.u32 %v199, 2147483648
  %v201 = vsel %vm118, %v200, %v199
  %v202 = vsub.s32 4, %v178
  %v203 = vsel %vm118, %v202, %v178
  %v204 = vsel %vm117, %v112, %v201
  %v205 = vsel %vm117, 0, %v203
  %v206 = vcosq.f32.pop %v204
  %v207 = vsinq.f32.pop %v204
  %vm208 = vweird.f32 %v112
  %v209 = vadd.s32 %v205, 3
  %v210 = vand.u32 %v209, 3
  %vm211 = vcmp.lt.s32.totalorder %v210, 2
  %vm212 = vcmp.eq.s32.totalorder %v210, 0
  %v213 = vxor.u32 %v207, 2147483648
  %v214 = vsel %vm212, %v206, %v213
  %vm215 = vcmp.eq.s32.totalorder %v210, 2
  %v216 = vxor.u32 %v206, 2147483648
  %v217 = vsel %vm215, %v216, %v207
  %v218 = vsel %vm211, %v214, %v217
  %v219 = vsel %vm208, nan, %v218
  %v220 = vand.u32 2147483647, %v114
  %vm221 = vcmp.le.f32.partialorder %v220, 0.7853982
  %vm222 = vcmp.lt.s32.totalorder %v114, 0
  %v223 = vand.u32 %v114, 2139095040
  %v224 = vshrl.u32 %v223, 23
  %v225 = vsub.s32 %v224, 127
  %v226 = vand.u32 2147483647, %v114
  %v227 = vand.u32 %v226, 8388607
  %v228 = vor.u32 %v227, 8388608
  %v229 = vsub.s32 0, %v228
  %v230 = vadd.s32 %v225, 1
  %vm231 = vcmp.gt.s32.totalorder %v230, 0
  %v232 = vsel %vm231, %v230, 0
  %v233 = vshrl.u32 %v232, 5
  %v234 = vand.u32 %v232, 31
  %v235 = vsub.s32 32, %v234
  %v236 = vshrl.u32 683565275, %v235
  %v237 = vshll.u32 683565275, %v234
  %v238 = vshrl.u32 2475754826, %v235
  %v239 = vor.u32 %v237, %v238
  %v240 = vshll.u32 2475754826, %v234
  %v241 = vshrl.u32 2131351028, %v235
  %v242 = vor.u32 %v240, %v241
  %v243 = vshll.u32 2131351028, %v234
  %v244 = vshrl.u32 2102212464, %v235
  %v245 = vor.u32 %v243, %v244
  %v246 = vshll.u32 2102212464, %v234
  %v247 = vshrl.u32 920167782, %v235
  %v248 = vor.u32 %v246, %v247
  %v249 = vshll.u32 920167782, %v234
  %v250 = vshrl.u32 1326507024, %v235
  %v251 = vor.u32 %v249, %v250
  %vm252 = vcmp.lt.s32.totalorder %v233, 1
  %vm253 = vcmp.lt.s32.totalorder %v233, 2
  %vm254 = vcmp.lt.s32.totalorder %v233, 3
  %vm255 = vcmp.lt.s32.totalorder %v233, 4
  %v256 = vsel %vm252, %v236, %v239
  %v257 = vsel %vm255, %v245, 2102212464
  %v258 = vsel %vm254, %v242, %v257
  %v259 = vsel %vm253, %v256, %v258
  %v260 = vsel %vm252, %v239, %v242
  %v261 = vsel %vm255, %v248, 920167782
  %v262 = vsel %vm254, %v245, %v261
  %v263 = vsel %vm253, %v260, %v262
  %v264 = vsel %vm252, %v242, %v245
  %v265 = vsel %vm255, %v251, 1326507024
  %v266 = vsel %vm254, %v248, %v265
  %v267 = vsel %vm253, %v264, %v266
  %v268 = vshll.u32 %v228, 8
  %v269 = vmul.u32.u64.compose %v268, %v267
  %v270 = vextract.low.u32 %v269
  %v271 = vextract.high.u32 %v269
  %v272 = vmul.u32.u64.compose %v268, %v263
  %v273 = vextract.low.u32 %v272
  %v274 = vextract.high.u32 %v272
  %v275 = vmul.u32 %v268, %v259
  %v276 = vadd.s32 %v271, %v273
  %vm277 = vc.u32 %v271, %v273
  %v278 = vadd.s32 %v274, 1
  %v279 = vsel %vm277, %v278, %v274
  %v280 = vadd.s32 %v275, %v279
  %v281 = vadd.s32 %v280, 536870912
  %v282 = vshrl.u32 %v281, 30
  %v283 = vshll.u32 %v282, 30
  %v284 = vsub.s32 %v280, %v283
  %vm285 = vcmp.lt.s32.totalorder %v284, 0
  %v286 = vsub.s32 0, %v284
  %v287 = vsel %vm285, %v286, %v284
  %v288 = vclz %v287
  %v289 = vsub.s32 %v288, 2
  %vm290 = vcmp.gt.s32.totalorder 0, %v289
  %v291 = vsel %vm290, 0, %v289
  %v292 = vsub.s32 32, %v291
  %v293 = vshll.u32 %v284, %v291
  %v294 = vshrl.u32 %v276, %v292
  %v295 = vor.u32 %v293, %v294
  %v296 = vsub.s32 4294967266, %v291
  %v297 = vadd.s32 %v296, 127
  %v298 = vshll.u32 %v297, 23
  %v299 = vor.u32 4788187, %v298
  %v300 = vand.u32 2147483647, %v299
  %v302 = vcvt.s32.f32 %v295
  %v303 = vmul.f32 %v302, %v300
  %v304 = vxor.u32 %v303, 2147483648
  %v305 = vsel %vm222, %v304, %v303
  %v306 = vsub.s32 4, %v282
  %v307 = vsel %vm222, %v306, %v282
  %v308 = vsel %vm221, %v114, %v305
  %v309 = vsel %vm221, 0, %v307
  %v310 = vcosq.f32.pop %v308
  %v311 = vsinq.f32.pop %v308
  %vm312 = vweird.f32 %v114
  %v313 = vadd.s32 %v309, 3
  %v314 = vand.u32 %v313, 3
  %vm315 = vcmp.lt.s32.totalorder %v314, 2
  %vm316 = vcmp.eq.s32.totalorder %v314, 0
  %v317 = vxor.u32 %v311, 2147483648
  %v318 = vsel %vm316, %v310, %v317
  %vm319 = vcmp.eq.s32.totalorder %v314, 2
  %v320 = vxor.u32 %v310, 2147483648
  %v321 = vsel %vm319, %v320, %v311
  %v322 = vsel %vm315, %v318, %v321
  %v323 = vsel %vm312, nan, %v322
  %v324 = vld [vmem:[%s3] sm:$0xff]
  %v325 = vld [vmem:[%s3 + $0x8] sm:$0xff]
  %v326 = vld [vmem:[%s3 + $0x10] sm:$0xff]
  %v327 = vld [vmem:[%s3 + $0x18] sm:$0xff]
  %v328 = vld [vmem:[%s3 + $0x20] sm:$0xff]
  %v329 = vld [vmem:[%s3 + $0x28] sm:$0xff]
  %v330 = vld [vmem:[%s3 + $0x30] sm:$0xff]
  %v331 = vld [vmem:[%s3 + $0x38] sm:$0xff]
  %v332 = vld [vmem:[%s3 + $0x40] sm:$0xff]
  %v333 = vld [vmem:[%s3 + $0x48] sm:$0xff]
  %v334 = vld [vmem:[%s3 + $0x50] sm:$0xff]
  %v335 = vld [vmem:[%s3 + $0x58] sm:$0xff]
  %v336 = vld [vmem:[%s3 + $0x60] sm:$0xff]
  %v337 = vld [vmem:[%s3 + $0x68] sm:$0xff]
  %v338 = vld [vmem:[%s3 + $0x70] sm:$0xff]
  %v339 = vld [vmem:[%s3 + $0x78] sm:$0xff]
  %v340 = vld [vmem:[%s3 + $0x80] sm:$0xff]
  %v341 = vld [vmem:[%s3 + $0x88] sm:$0xff]
  %v342 = vld [vmem:[%s3 + $0x90] sm:$0xff]
  %v343 = vld [vmem:[%s3 + $0x98] sm:$0xff]
  %v344 = vld [vmem:[%s3 + $0xa0] sm:$0xff]
  %v345 = vld [vmem:[%s3 + $0xa8] sm:$0xff]
  %v346 = vld [vmem:[%s3 + $0xb0] sm:$0xff]
  %v347 = vld [vmem:[%s3 + $0xb8] sm:$0xff]
  %v348 = vld [vmem:[%s3 + $0xc0] sm:$0xff]
  %v349 = vld [vmem:[%s3 + $0xc8] sm:$0xff]
  %v350 = vld [vmem:[%s3 + $0xd0] sm:$0xff]
  %v351 = vld [vmem:[%s3 + $0xd8] sm:$0xff]
  %v352 = vld [vmem:[%s3 + $0xe0] sm:$0xff]
  %v353 = vld [vmem:[%s3 + $0xe8] sm:$0xff]
  %v354 = vld [vmem:[%s3 + $0xf0] sm:$0xff]
  %v355 = vld [vmem:[%s3 + $0xf8] sm:$0xff]
  %v356 = vld [vmem:[%s4] sm:$0x1]
  %v358 = vlaneseq
  %v359 = vshrl.u32 %v358, 7
  %v360 = vsub.s32 0, %v359
  %v361 = vrot.slane %v356, %v360
  %363 = vmatprep.subr.mxu0 0.0
  %364 = vmatpush1.msra.mxu0 %v339
  %365 = vmatprep.subr.mxu0 0.0
  %366 = vmatpush1.msra.mxu0 %v338
  %367 = vmatprep.subr.mxu0 0.0
  %368 = vmatpush1.msra.mxu0 %v337
  %369 = vmatprep.subr.mxu0 0.0
  %370 = vmatpush1.msra.mxu0 %v336
  %371 = vmatprep.subr.mxu0 0.0
  %372 = vmatpush1.msra.mxu0 %v335
  %373 = vmatprep.subr.mxu0 0.0
  %374 = vmatpush1.msra.mxu0 %v334
  %375 = vmatprep.subr.mxu0 0.0
  %376 = vmatpush1.msra.mxu0 %v333
  %377 = vmatprep.subr.mxu0 0.0
  %378 = vmatpush1.msra.mxu0 %v332
  %379 = vmatprep.subr.mxu0 0.0
  %380 = vmatpush1.msra.mxu0 %v331
  %381 = vmatprep.subr.mxu0 0.0
  %382 = vmatpush1.msra.mxu0 %v330
  %383 = vmatprep.subr.mxu0 0.0
  %384 = vmatpush1.msra.mxu0 %v329
  %385 = vmatprep.subr.mxu0 0.0
  %386 = vmatpush1.msra.mxu0 %v328
  %387 = vmatprep.subr.mxu0 0.0
  %388 = vmatpush1.msra.mxu0 %v327
  %389 = vmatprep.subr.mxu0 0.0
  %390 = vmatpush1.msra.mxu0 %v326
  %391 = vmatprep.subr.mxu0 0.0
  %392 = vmatpush1.msra.mxu0 %v325
  %393 = vmatprep.subr.mxu0 0.0
  %394 = vmatpush1.msra.mxu0 %v324
  %395 = vmatprep.subr.mxu0 0.0
  %396 = vmatpush2.msra.mxu0 %v355
  %397 = vmatprep.subr.mxu0 0.0
  %398 = vmatpush2.msra.mxu0 %v354
  %399 = vmatprep.subr.mxu0 0.0
  %400 = vmatpush2.msra.mxu0 %v353
  %401 = vmatprep.subr.mxu0 0.0
  %402 = vmatpush2.msra.mxu0 %v352
  %403 = vmatprep.subr.mxu0 0.0
  %404 = vmatpush2.msra.mxu0 %v351
  %405 = vmatprep.subr.mxu0 0.0
  %406 = vmatpush2.msra.mxu0 %v350
  %407 = vmatprep.subr.mxu0 0.0
  %408 = vmatpush2.msra.mxu0 %v349
  %409 = vmatprep.subr.mxu0 0.0
  %410 = vmatpush2.msra.mxu0 %v348
  %411 = vmatprep.subr.mxu0 0.0
  %412 = vmatpush2.msra.mxu0 %v347
  %413 = vmatprep.subr.mxu0 0.0
  %414 = vmatpush2.msra.mxu0 %v346
  %415 = vmatprep.subr.mxu0 0.0
  %416 = vmatpush2.msra.mxu0 %v345
  %417 = vmatprep.subr.mxu0 0.0
  %418 = vmatpush2.msra.mxu0 %v344
  %419 = vmatprep.subr.mxu0 0.0
  %420 = vmatpush2.msra.mxu0 %v343
  %421 = vmatprep.subr.mxu0 0.0
  %422 = vmatpush2.msra.mxu0 %v342
  %423 = vmatprep.subr.mxu0 0.0
  %424 = vmatpush2.msra.mxu0 %v341
  %425 = vmatprep.subr.mxu0 0.0
  %426 = vmatpush2.msra.mxu0 %v340
  %427 = vmatprep.mubr.f32.mxu0 %v323
  %428 = vmatmul.mubr.f32.gmra.mxu0 %v219
  %v429 = vpop.f32.mrf.mxu0
  %v430 = vadd.f32 %v361, %v429
  %v431 = vpop.f32.mrf.mxu0
  %432 = vdwg.mxu0
  %v433 = vmul.f32 %v430, 0.5
  %v434 = vrcp.pop 1.4142135
  %v435 = vmul.f32 %v430, %v434
  %v436 = verf.f32.pop %v435
  %v437 = vadd.f32 %v436, 1.0
  %v438 = vmul.f32 %v433, %v437
  %v439 = vld [vmem:[%s5] sm:$0xff]
  %v440 = vld [vmem:[%s5 + $0x8] sm:$0xff]
  %v441 = vld [vmem:[%s5 + $0x10] sm:$0xff]
  %v442 = vld [vmem:[%s5 + $0x18] sm:$0xff]
  %v443 = vld [vmem:[%s5 + $0x20] sm:$0xff]
  %v444 = vld [vmem:[%s5 + $0x28] sm:$0xff]
  %v445 = vld [vmem:[%s5 + $0x30] sm:$0xff]
  %v446 = vld [vmem:[%s5 + $0x38] sm:$0xff]
  %v447 = vld [vmem:[%s5 + $0x40] sm:$0xff]
  %v448 = vld [vmem:[%s5 + $0x48] sm:$0xff]
  %v449 = vld [vmem:[%s5 + $0x50] sm:$0xff]
  %v450 = vld [vmem:[%s5 + $0x58] sm:$0xff]
  %v451 = vld [vmem:[%s5 + $0x60] sm:$0xff]
  %v452 = vld [vmem:[%s5 + $0x68] sm:$0xff]
  %v453 = vld [vmem:[%s5 + $0x70] sm:$0xff]
  %v454 = vld [vmem:[%s5 + $0x78] sm:$0xff]
  %v455 = vld [vmem:[%s5 + $0x80] sm:$0xff]
  %v456 = vld [vmem:[%s5 + $0x88] sm:$0xff]
  %v457 = vld [vmem:[%s5 + $0x90] sm:$0xff]
  %v458 = vld [vmem:[%s5 + $0x98] sm:$0xff]
  %v459 = vld [vmem:[%s5 + $0xa0] sm:$0xff]
  %v460 = vld [vmem:[%s5 + $0xa8] sm:$0xff]
  %v461 = vld [vmem:[%s5 + $0xb0] sm:$0xff]
  %v462 = vld [vmem:[%s5 + $0xb8] sm:$0xff]
  %v463 = vld [vmem:[%s5 + $0xc0] sm:$0xff]
  %v464 = vld [vmem:[%s5 + $0xc8] sm:$0xff]
  %v465 = vld [vmem:[%s5 + $0xd0] sm:$0xff]
  %v466 = vld [vmem:[%s5 + $0xd8] sm:$0xff]
  %v467 = vld [vmem:[%s5 + $0xe0] sm:$0xff]
  %v468 = vld [vmem:[%s5 + $0xe8] sm:$0xff]
  %v469 = vld [vmem:[%s5 + $0xf0] sm:$0xff]
  %v470 = vld [vmem:[%s5 + $0xf8] sm:$0xff]
  %v471 = vld [vmem:[%s5 + $0x100] sm:$0xff]
  %v472 = vld [vmem:[%s5 + $0x108] sm:$0xff]
  %v473 = vld [vmem:[%s5 + $0x110] sm:$0xff]
  %v474 = vld [vmem:[%s5 + $0x118] sm:$0xff]
  %v475 = vld [vmem:[%s5 + $0x120] sm:$0xff]
  %v476 = vld [vmem:[%s5 + $0x128] sm:$0xff]
  %v477 = vld [vmem:[%s5 + $0x130] sm:$0xff]
  %v478 = vld [vmem:[%s5 + $0x138] sm:$0xff]
  %v479 = vld [vmem:[%s5 + $0x140] sm:$0xff]
  %v480 = vld [vmem:[%s5 + $0x148] sm:$0xff]
  %v481 = vld [vmem:[%s5 + $0x150] sm:$0xff]
  %v482 = vld [vmem:[%s5 + $0x158] sm:$0xff]
  %v483 = vld [vmem:[%s5 + $0x160] sm:$0xff]
  %v484 = vld [vmem:[%s5 + $0x168] sm:$0xff]
  %v485 = vld [vmem:[%s5 + $0x170] sm:$0xff]
  %v486 = vld [vmem:[%s5 + $0x178] sm:$0xff]
  %v487 = vld [vmem:[%s5 + $0x180] sm:$0xff]
  %v488 = vld [vmem:[%s5 + $0x188] sm:$0xff]
  %v489 = vld [vmem:[%s5 + $0x190] sm:$0xff]
  %v490 = vld [vmem:[%s5 + $0x198] sm:$0xff]
  %v491 = vld [vmem:[%s5 + $0x1a0] sm:$0xff]
  %v492 = vld [vmem:[%s5 + $0x1a8] sm:$0xff]
  %v493 = vld [vmem:[%s5 + $0x1b0] sm:$0xff]
  %v494 = vld [vmem:[%s5 + $0x1b8] sm:$0xff]
  %v495 = vld [vmem:[%s5 + $0x1c0] sm:$0xff]
  %v496 = vld [vmem:[%s5 + $0x1c8] sm:$0xff]
  %v497 = vld [vmem:[%s5 + $0x1d0] sm:$0xff]
  %v498 = vld [vmem:[%s5 + $0x1d8] sm:$0xff]
  %v499 = vld [vmem:[%s5 + $0x1e0] sm:$0xff]
  %v500 = vld [vmem:[%s5 + $0x1e8] sm:$0xff]
  %v501 = vld [vmem:[%s5 + $0x1f0] sm:$0xff]
  %v502 = vld [vmem:[%s5 + $0x1f8] sm:$0xff]
  %v503 = vld [vmem:[%s6] sm:$0xf]
  %v505 = vlaneseq
  %v506 = vshrl.u32 %v505, 7
  %v507 = vsub.s32 0, %v506
  %v508 = vrot.slane %v503, %v507
  %v509 = vlaneseq
  %v510 = vshrl.u32 %v509, 7
  %v511 = vsub.s32 1, %v510
  %v512 = vrot.slane %v503, %v511
  %v513 = vlaneseq
  %v514 = vshrl.u32 %v513, 7
  %v515 = vsub.s32 2, %v514
  %v516 = vrot.slane %v503, %v515
  %v517 = vlaneseq
  %v518 = vshrl.u32 %v517, 7
  %v519 = vsub.s32 3, %v518
  %v520 = vrot.slane %v503, %v519
  %525 = vmatprep.subr.mxu0 %v500
  %526 = vmatpush1.msra.mxu0 %v499
  %527 = vmatprep.subr.mxu0 %v496
  %528 = vmatpush1.msra.mxu0 %v495
  %529 = vmatprep.subr.mxu0 %v492
  %530 = vmatpush1.msra.mxu0 %v491
  %531 = vmatprep.subr.mxu0 %v488
  %532 = vmatpush1.msra.mxu0 %v487
  %533 = vmatprep.subr.mxu0 %v484
  %534 = vmatpush1.msra.mxu0 %v483
  %535 = vmatprep.subr.mxu0 %v480
  %536 = vmatpush1.msra.mxu0 %v479
  %537 = vmatprep.subr.mxu0 %v476
  %538 = vmatpush1.msra.mxu0 %v475
  %539 = vmatprep.subr.mxu0 %v472
  %540 = vmatpush1.msra.mxu0 %v471
  %541 = vmatprep.subr.mxu0 %v468
  %542 = vmatpush1.msra.mxu0 %v467
  %543 = vmatprep.subr.mxu0 %v464
  %544 = vmatpush1.msra.mxu0 %v463
  %545 = vmatprep.subr.mxu0 %v460
  %546 = vmatpush1.msra.mxu0 %v459
  %547 = vmatprep.subr.mxu0 %v456
  %548 = vmatpush1.msra.mxu0 %v455
  %549 = vmatprep.subr.mxu0 %v452
  %550 = vmatpush1.msra.mxu0 %v451
  %551 = vmatprep.subr.mxu0 %v448
  %552 = vmatpush1.msra.mxu0 %v447
  %553 = vmatprep.subr.mxu0 %v444
  %554 = vmatpush1.msra.mxu0 %v443
  %555 = vmatprep.subr.mxu0 %v440
  %556 = vmatpush1.msra.mxu0 %v439
  %557 = vmatprep.subr.mxu0 0.0
  %558 = vmatpush2.msra.mxu0 0.0
  %559 = vmatprep.subr.mxu0 0.0
  %560 = vmatpush2.msra.mxu0 0.0
  %561 = vmatprep.subr.mxu0 0.0
  %562 = vmatpush2.msra.mxu0 0.0
  %563 = vmatprep.subr.mxu0 0.0
  %564 = vmatpush2.msra.mxu0 0.0
  %565 = vmatprep.subr.mxu0 0.0
  %566 = vmatpush2.msra.mxu0 0.0
  %567 = vmatprep.subr.mxu0 0.0
  %568 = vmatpush2.msra.mxu0 0.0
  %569 = vmatprep.subr.mxu0 0.0
  %570 = vmatpush2.msra.mxu0 0.0
  %571 = vmatprep.subr.mxu0 0.0
  %572 = vmatpush2.msra.mxu0 0.0
  %573 = vmatprep.subr.mxu0 0.0
  %574 = vmatpush2.msra.mxu0 0.0
  %575 = vmatprep.subr.mxu0 0.0
  %576 = vmatpush2.msra.mxu0 0.0
  %577 = vmatprep.subr.mxu0 0.0
  %578 = vmatpush2.msra.mxu0 0.0
  %579 = vmatprep.subr.mxu0 0.0
  %580 = vmatpush2.msra.mxu0 0.0
  %581 = vmatprep.subr.mxu0 0.0
  %582 = vmatpush2.msra.mxu0 0.0
  %583 = vmatprep.subr.mxu0 0.0
  %584 = vmatpush2.msra.mxu0 0.0
  %585 = vmatprep.subr.mxu0 0.0
  %586 = vmatpush2.msra.mxu0 0.0
  %587 = vmatprep.subr.mxu0 0.0
  %588 = vmatpush2.msra.mxu0 0.0
  %589 = vmatprep.mubr.f32.mxu0 0.0
  %590 = vmatmul.mubr.f32.gmra.mxu0 %v438
  %v591 = vpop.f32.mrf.mxu0
  %v592 = vadd.f32 %v508, %v591
  %v593 = vpop.f32.mrf.mxu0
  %v594 = vadd.f32 %v512, %v593
  %595 = vdwg.mxu0
  %596 = vmatprep.subr.mxu0 %v502
  %597 = vmatpush1.msra.mxu0 %v501
  %598 = vmatprep.subr.mxu0 %v498
  %599 = vmatpush1.msra.mxu0 %v497
  %600 = vmatprep.subr.mxu0 %v494
  %601 = vmatpush1.msra.mxu0 %v493
  %602 = vmatprep.subr.mxu0 %v490
  %603 = vmatpush1.msra.mxu0 %v489
  %604 = vmatprep.subr.mxu0 %v486
  %605 = vmatpush1.msra.mxu0 %v485
  %606 = vmatprep.subr.mxu0 %v482
  %607 = vmatpush1.msra.mxu0 %v481
  %608 = vmatprep.subr.mxu0 %v478
  %609 = vmatpush1.msra.mxu0 %v477
  %610 = vmatprep.subr.mxu0 %v474
  %611 = vmatpush1.msra.mxu0 %v473
  %612 = vmatprep.subr.mxu0 %v470
  %613 = vmatpush1.msra.mxu0 %v469
  %614 = vmatprep.subr.mxu0 %v466
  %615 = vmatpush1.msra.mxu0 %v465
  %616 = vmatprep.subr.mxu0 %v462
  %617 = vmatpush1.msra.mxu0 %v461
  %618 = vmatprep.subr.mxu0 %v458
  %619 = vmatpush1.msra.mxu0 %v457
  %620 = vmatprep.subr.mxu0 %v454
  %621 = vmatpush1.msra.mxu0 %v453
  %622 = vmatprep.subr.mxu0 %v450
  %623 = vmatpush1.msra.mxu0 %v449
  %624 = vmatprep.subr.mxu0 %v446
  %625 = vmatpush1.msra.mxu0 %v445
  %626 = vmatprep.subr.mxu0 %v442
  %627 = vmatpush1.msra.mxu0 %v441
  %628 = vmatprep.subr.mxu0 0.0
  %629 = vmatpush2.msra.mxu0 0.0
  %630 = vmatprep.subr.mxu0 0.0
  %631 = vmatpush2.msra.mxu0 0.0
  %632 = vmatprep.subr.mxu0 0.0
  %633 = vmatpush2.msra.mxu0 0.0
  %634 = vmatprep.subr.mxu0 0.0
  %635 = vmatpush2.msra.mxu0 0.0
  %636 = vmatprep.subr.mxu0 0.0
  %637 = vmatpush2.msra.mxu0 0.0
  %638 = vmatprep.subr.mxu0 0.0
  %639 = vmatpush2.msra.mxu0 0.0
  %640 = vmatprep.subr.mxu0 0.0
  %641 = vmatpush2.msra.mxu0 0.0
  %642 = vmatprep.subr.mxu0 0.0
  %643 = vmatpush2.msra.mxu0 0.0
  %644 = vmatprep.subr.mxu0 0.0
  %645 = vmatpush2.msra.mxu0 0.0
  %646 = vmatprep.subr.mxu0 0.0
  %647 = vmatpush2.msra.mxu0 0.0
  %648 = vmatprep.subr.mxu0 0.0
  %649 = vmatpush2.msra.mxu0 0.0
  %650 = vmatprep.subr.mxu0 0.0
  %651 = vmatpush2.msra.mxu0 0.0
  %652 = vmatprep.subr.mxu0 0.0
  %653 = vmatpush2.msra.mxu0 0.0
  %654 = vmatprep.subr.mxu0 0.0
  %655 = vmatpush2.msra.mxu0 0.0
  %656 = vmatprep.subr.mxu0 0.0
  %657 = vmatpush2.msra.mxu0 0.0
  %658 = vmatprep.subr.mxu0 0.0
  %659 = vmatpush2.msra.mxu0 0.0
  %660 = vmatprep.mubr.f32.mxu0 0.0
  %661 = vmatmul.mubr.f32.gmra.mxu0 %v438
  %v662 = vpop.f32.mrf.mxu0
  %v663 = vadd.f32 %v516, %v662
  %v664 = vpop.f32.mrf.mxu0
  %v665 = vadd.f32 %v520, %v664
  %666 = vdwg.mxu0
  %667 = vst [vmem:[%s7] sm:$0xff] %v592
  %668 = vst [vmem:[%s7 + $0x8] sm:$0xff] %v594
  %669 = vst [vmem:[%s7 + $0x10] sm:$0xff] %v663
  %670 = vst [vmem:[%s7 + $0x18] sm:$0xff] %v665
  // Predicated region
  $region30: #{learnable_fourier_pe.1} parent=0 // pred_check
    _
  $region31: #{learnable_fourier_pe.1} parent=0 // pred_check_branch
    %672 = sbr.rel (0) target = $region33
  $region32: #{learnable_fourier_pe.1} parent=0 // pred_region
    _
  $region33: #{learnable_fourier_pe.1} parent=0 // pred_fallthru
    _
  // Predicated region
  $region34: #{learnable_fourier_pe.1} parent=0 // pred_check
    _
  $region35: #{learnable_fourier_pe.1} parent=0 // pred_check_branch
    %674 = sbr.rel (0) target = $region37
  $region36: #{learnable_fourier_pe.1} parent=0 // pred_region
    _
  $region37: #{learnable_fourier_pe.1} parent=0 // pred_fallthru
    _

</llo_original>
